<compile_context>
chip_gen: v7x
topology: tpu7x:2x2x1
jax: 0.10.0
libtpu: 0.0.40
codegen_flags: <defaults>
</compile_context>

<pallas_src>
import functools

import jax
import jax.numpy as jnp
from jax.experimental import pallas as pl
from jax.experimental.pallas import tpu as pltpu


def _round_up(x, m):
    return ((x + m - 1) // m) * m


# ---------------------------------------------------------------------------
# Fused kernel:  out[b, i-tile, :] = relu( (sum_k A[i,k] @ x[b,k,:]) @ W^T )
# grid = (B, Nm // tm, Nk // tk);  k (reduction over N) is the last axis.
# ---------------------------------------------------------------------------
def _gcn_fused_kernel(a_ref, x_ref, w_ref, o_ref, acc_ref):
    k = pl.program_id(2)

    @pl.when(k == 0)
    def _init():
        acc_ref[...] = jnp.zeros_like(acc_ref)

    # (tm, tk) bf16 @ (tk, F_in_pad) bf16 -> f32 accumulation on the MXU.
    acc_ref[...] += jnp.dot(a_ref[...], x_ref[0],
                            preferred_element_type=jnp.float32)

    @pl.when(k == pl.num_programs(2) - 1)
    def _finalize():
        # Theta matmul on the f32 accumulator (no bf16 re-rounding of the
        # intermediate) + fused ReLU, stored lane-dense.
        z = jnp.dot(acc_ref[...], w_ref[...],
                    preferred_element_type=jnp.float32)
        o_ref[0] = jnp.maximum(z, 0.0).astype(o_ref.dtype)


# ---------------------------------------------------------------------------
# GCN forward
# ---------------------------------------------------------------------------
def gcn_forward(adj, weight, x, *, compute_dtype=jnp.bfloat16,
                tm_target=512, tk_target=512):
    """adj: (N, N) sym-normalized adjacency; weight: (F_out, F_in) (nn.Linear
    layout, bias=False); x: (B, N, F_in).  Returns (B, N, F_out)."""
    B, N, F_in = x.shape
    F_out, F_in2 = weight.shape
    assert F_in == F_in2, (weight.shape, x.shape)
    out_dtype = x.dtype

    # Lane-dense feature pads (>= 128, multiple of 128).
    F_in_pad = _round_up(F_in, 128)
    F_out_pad = _round_up(F_out, 128)

    # Tile sizes: tm aligned to 16 (bf16 sublane packing), tk to 128 (lanes).
    tm = min(tm_target, _round_up(N, 16))
    tk = min(tk_target, _round_up(N, 128))
    Nm = _round_up(N, tm)   # padded row count of A / output
    Nk = _round_up(N, tk)   # padded col count of A / row count of x

    # Zero padding keeps the math exact (padded cols of A hit padded zero rows
    # of x; padded output rows/cols are sliced off).
    adj_p = jnp.pad(adj.astype(compute_dtype), ((0, Nm - N), (0, Nk - N)))
    x_p = jnp.pad(x.astype(compute_dtype),
                  ((0, 0), (0, Nk - N), (0, F_in_pad - F_in)))
    # W^T kept in f32 (tiny, VMEM-resident) so the second matmul sees the f32
    # accumulator without an extra rounding step.
    w_p = jnp.pad(weight.T.astype(jnp.float32),
                  ((0, F_in_pad - F_in), (0, F_out_pad - F_out)))

    grid = (B, Nm // tm, Nk // tk)

    elt = jnp.dtype(compute_dtype).itemsize
    cost = pl.CostEstimate(
        flops=2 * B * Nm * Nk * F_in_pad + 2 * B * Nm * F_in_pad * F_out_pad,
        transcendentals=0,
        bytes_accessed=int(
            B * Nm * Nk * elt                              # A read once per batch
            + (Nm // tm) * B * Nk * F_in_pad * elt         # x re-read per row tile
            + F_in_pad * F_out_pad * 4                     # W (VMEM-resident)
            + B * Nm * F_out_pad * jnp.dtype(out_dtype).itemsize),
    )

    out_p = pl.pallas_call(
        _gcn_fused_kernel,
        out_shape=jax.ShapeDtypeStruct((B, Nm, F_out_pad), out_dtype),
        grid_spec=pltpu.PrefetchScalarGridSpec(
            num_scalar_prefetch=0,
            grid=grid,
            in_specs=[
                pl.BlockSpec((tm, tk), lambda b, i, k: (i, k)),            # A
                pl.BlockSpec((1, tk, F_in_pad), lambda b, i, k: (b, k, 0)),  # x
                pl.BlockSpec((F_in_pad, F_out_pad), lambda b, i, k: (0, 0)),  # W^T
            ],
            out_specs=pl.BlockSpec((1, tm, F_out_pad),
                                   lambda b, i, k: (b, i, 0)),
            scratch_shapes=[pltpu.VMEM((tm, F_in_pad), jnp.float32)],
        ),
        compiler_params=pltpu.CompilerParams(
            dimension_semantics=("parallel", "parallel", "arbitrary"),
        ),
        cost_estimate=cost,
    )(adj_p, x_p, w_p)

    return out_p[:, :N, :F_out]


# ---------------------------------------------------------------------------
# Helpers for the self-test
# ---------------------------------------------------------------------------
def make_sym_norm_adj(key, n):
    """Deterministic random graph -> D^{-1/2} (A + I) D^{-1/2}."""
    a = (jax.random.uniform(key, (n, n)) > 0.7).astype(jnp.float32)
    a = jnp.maximum(a, a.T)                       # symmetrize
    a = a + jnp.eye(n, dtype=jnp.float32)         # self loops
    deg = jnp.sum(a, axis=1)
    d_inv_sqrt = 1.0 / jnp.sqrt(deg)
    return a * d_inv_sqrt[:, None] * d_inv_sqrt[None, :]


def reference_forward(adj, weight, x):
    ax = jnp.einsum("nm,bmf->bnf", adj, x)
    return jax.nn.relu(jnp.einsum("bnf,of->bno", ax, weight))


if __name__ == "__main__":
    key = jax.random.PRNGKey(0)
    k_adj, k_w, k_x = jax.random.split(key, 3)

    B, N, F_in, F_out = 2, 16, 32, 32

    adj = make_sym_norm_adj(k_adj, N)
    # nn.Linear(in, out, bias=False) default init: U(-1/sqrt(in), 1/sqrt(in))
    bound = 1.0 / (F_in ** 0.5)
    weight = jax.random.uniform(k_w, (F_out, F_in), minval=-bound, maxval=bound,
                                dtype=jnp.float32)
    x = jax.random.normal(k_x, (B, N, F_in), dtype=jnp.float32)

    out = jax.jit(gcn_forward)(adj, weight, x)
    out = jax.block_until_ready(out)
    assert out.shape == (B, N, F_out), out.shape

    # Reference on the same bf16-rounded adjacency/x (the kernel's only
    # low-precision step); W and the intermediate stay f32 in the kernel.
    adj_r = adj.astype(jnp.bfloat16).astype(jnp.float32)
    x_r = x.astype(jnp.bfloat16).astype(jnp.float32)
    ref = reference_forward(adj_r, weight, x_r)
    assert jnp.allclose(out, ref, atol=2e-2, rtol=2e-2), (
        float(jnp.max(jnp.abs(out - ref))))

    print("KERNEL_OK")
</pallas_src>

<mosaic_0001>
module attributes {stable_mosaic.version = 11 : i64} {
  func.func @_gcn_fused_kernel(%arg0: i32, %arg1: i32, %arg2: i32, %arg3: memref<16x128xbf16, #tpu.memory_space<vmem>>, %arg4: memref<1x128x128xbf16, #tpu.memory_space<vmem>>, %arg5: memref<128x128xf32, #tpu.memory_space<vmem>>, %arg6: memref<1x16x128xf32, #tpu.memory_space<vmem>>, %arg7: memref<16x128xf32, #tpu.memory_space<vmem>>) attributes {dimension_semantics = [#tpu.dimension_semantics<parallel>, #tpu.dimension_semantics<parallel>, #tpu.dimension_semantics<arbitrary>], iteration_bounds = array<i64: 2, 1, 1>, scalar_prefetch = 0 : i64, scratch_operands = 1 : i64, tpu.core_type = #tpu.core_type<tc>, window_params = [{transform_indices = @transform_0, window_bounds = array<i64: 16, 128>}, {transform_indices = @transform_1, window_bounds = array<i64: 1, 128, 128>}, {pipeline_mode = #tpu.pipeline_mode<synchronous>, transform_indices = @transform_2, window_bounds = array<i64: 128, 128>}, {transform_indices = @transform_3, window_bounds = array<i64: 1, 16, 128>}]} {
    %c0_i32 = arith.constant 0 : i32
    %0 = arith.cmpi eq, %arg2, %c0_i32 : i32
    %1 = arith.extui %0 : i1 to i32
    %c0_i32_0 = arith.constant 0 : i32
    %2 = arith.cmpi ne, %1, %c0_i32_0 : i32
    scf.if %2 {
      %cst_11 = arith.constant 0.000000e+00 : f32
      %13 = vector.broadcast %cst_11 : f32 to vector<16x128xf32>
      %c0_12 = arith.constant 0 : index
      %c0_13 = arith.constant 0 : index
      %14 = vector.load %arg7[%c0_12, %c0_13] : memref<16x128xf32, #tpu.memory_space<vmem>>, vector<16x128xf32>
      tpu.vector_store %arg7[%c0_12, %c0_13], %13 {strides = array<i32>} : memref<16x128xf32, #tpu.memory_space<vmem>>, vector<16x128xf32>,
    } else {
    }
    %c0 = arith.constant 0 : index
    %c0_1 = arith.constant 0 : index
    %3 = vector.load %arg7[%c0, %c0_1] : memref<16x128xf32, #tpu.memory_space<vmem>>, vector<16x128xf32>
    %c0_2 = arith.constant 0 : index
    %c0_3 = arith.constant 0 : index
    %4 = vector.load %arg3[%c0_2, %c0_3] : memref<16x128xbf16, #tpu.memory_space<vmem>>, vector<16x128xbf16>
    %c0_4 = arith.constant 0 : index
    %c0_5 = arith.constant 0 : index
    %c0_6 = arith.constant 0 : index
    %5 = vector.load %arg4[%c0_4, %c0_5, %c0_6] : memref<1x128x128xbf16, #tpu.memory_space<vmem>>, vector<1x128x128xbf16>
    %6 = vector.shape_cast %5 : vector<1x128x128xbf16> to vector<128x128xbf16>
    %cst = arith.constant dense<0.000000e+00> : vector<16x128xf32>
    %7 = tpu.matmul %4, %6, %cst {dimension_numbers = #tpu.dot_dimension_numbers<[1], [0], [0], [1], [0, 0, 1, 1], [], []>} : vector<16x128xbf16>, vector<128x128xbf16>, vector<16x128xf32> -> vector<16x128xf32>
    %8 = arith.addf %3, %7 : vector<16x128xf32>
    %c0_7 = arith.constant 0 : index
    %c0_8 = arith.constant 0 : index
    %9 = vector.load %arg7[%c0_7, %c0_8] : memref<16x128xf32, #tpu.memory_space<vmem>>, vector<16x128xf32>
    tpu.vector_store %arg7[%c0_7, %c0_8], %8 {strides = array<i32>} : memref<16x128xf32, #tpu.memory_space<vmem>>, vector<16x128xf32>,
    %c0_i32_9 = arith.constant 0 : i32
    %10 = arith.cmpi eq, %arg2, %c0_i32_9 : i32
    %11 = arith.extui %10 : i1 to i32
    %c0_i32_10 = arith.constant 0 : i32
    %12 = arith.cmpi ne, %11, %c0_i32_10 : i32
    scf.if %12 {
      %c0_11 = arith.constant 0 : index
      %c0_12 = arith.constant 0 : index
      %13 = vector.load %arg7[%c0_11, %c0_12] : memref<16x128xf32, #tpu.memory_space<vmem>>, vector<16x128xf32>
      %c0_13 = arith.constant 0 : index
      %c0_14 = arith.constant 0 : index
      %14 = vector.load %arg5[%c0_13, %c0_14] : memref<128x128xf32, #tpu.memory_space<vmem>>, vector<128x128xf32>
      %cst_15 = arith.constant dense<0.000000e+00> : vector<16x128xf32>
      %15 = tpu.matmul %13, %14, %cst_15 {dimension_numbers = #tpu.dot_dimension_numbers<[1], [0], [0], [1], [0, 0, 1, 1], [], []>} : vector<16x128xf32>, vector<128x128xf32>, vector<16x128xf32> -> vector<16x128xf32>
      %cst_16 = arith.constant 0.000000e+00 : f32
      %16 = vector.broadcast %cst_16 : f32 to vector<16x128xf32>
      %17 = arith.maximumf %15, %16 : vector<16x128xf32>
      %c0_17 = arith.constant 0 : index
      %c0_18 = arith.constant 0 : index
      %c0_19 = arith.constant 0 : index
      %18 = vector.load %arg6[%c0_17, %c0_18, %c0_19] : memref<1x16x128xf32, #tpu.memory_space<vmem>>, vector<1x16x128xf32>
      %19 = vector.shape_cast %18 : vector<1x16x128xf32> to vector<16x128xf32>
      %20 = vector.shape_cast %17 : vector<16x128xf32> to vector<1x16x128xf32>
      tpu.vector_store %arg6[%c0_17, %c0_18, %c0_19], %20 {strides = array<i32>} : memref<1x16x128xf32, #tpu.memory_space<vmem>>, vector<1x16x128xf32>,
    } else {
    }
    return
  }
  func.func @transform_0(%arg0: i32, %arg1: i32, %arg2: i32) -> (i32, i32) {
    %c0_i32 = arith.constant 0 : i32
    return %arg1, %arg2 : i32, i32
  }
  func.func @transform_1(%arg0: i32, %arg1: i32, %arg2: i32) -> (i32, i32, i32) {
    %c0_i32 = arith.constant 0 : i32
    %c0_i32_0 = arith.constant 0 : i32
    return %arg0, %arg2, %c0_i32 : i32, i32, i32
  }
  func.func @transform_2(%arg0: i32, %arg1: i32, %arg2: i32) -> (i32, i32) {
    %c0_i32 = arith.constant 0 : i32
    %c0_i32_0 = arith.constant 0 : i32
    %c0_i32_1 = arith.constant 0 : i32
    return %c0_i32, %c0_i32_0 : i32, i32
  }
  func.func @transform_3(%arg0: i32, %arg1: i32, %arg2: i32) -> (i32, i32, i32) {
    %c0_i32 = arith.constant 0 : i32
    %c0_i32_0 = arith.constant 0 : i32
    return %arg0, %arg1, %c0_i32 : i32, i32, i32
  }
}

</mosaic_0001>

<llo_original>
// kernel: gcn_forward.1
$region0: #{gcn_forward.1}
  #allocation0 [shape = 'u32[]', space=smem, size = 0x4, offset = 0x4, fixed_abs, tag = 'smem constant byte address 0x4 - core index']
  #allocation1 [shape = 'u32[144,128]{1,0:T(1,128)}', space=vmem, size = 0x12000, scoped, tag = 'internal scratch']
  #allocation2 [shape = 'f32[16,128]{1,0:T(8,128)}', space=vmem, size = 0x2000, scoped, tag = 'scratch operand']
  %s0 = inlined_call_operand.vmem [shape: bf16[16,128], index: 0, kind: input, shape index: {}]
  %s1 = inlined_call_operand.vmem [shape: bf16[2,128,128], index: 1, kind: input, shape index: {}]
  %s2 = inlined_call_operand.vmem [shape: f32[128,128], index: 2, kind: input, shape index: {}]
  %s3 = inlined_call_operand.hbm [shape: f32[2,16,128], index: 3, kind: output, shape index: {}]
  %s4 = sld [smem:[#allocation0]]
  $region53: #{gcn_forward.1} parent=0
    _
  %s6 = ssub.s32 1, %s4
  %s7 = scalar_select 0, %s6, %s4
  $region1: #{gcn_forward.1} parent=0
    #allocation3 [shape = 'u8[16384]{0}', space=vmem, size = 0x4000, scoped, tag = 'output window, operand 0']
    #allocation4 [shape = 's32[2]{0}', space=sflag, size = 0x8, scoped, tag = 'scoped memory for gcn_forward.1']
    %8 = vsyncpa [#allocation4], 0
    %s9 = scalar_lea.sflag [#allocation4], 1
    %10 = vsyncpa %s9, 0
    loop: start=0, step=1, limit=4
    $region2: #{gcn_forward.1} parent=1 // loop_pre_header
      _
    $region3: #{gcn_forward.1} parent=1 // loop_header
      %s12 = sphi 0, %s16
      %p13 = scmp.ge.s32.totalorder %s12, 4
      %s19 = sphi 0, %s38
      %s20 = sphi 0, %s34
      %s21 = sphi 0, %s30
      %s22 = sphi 0, %s19
      %s23 = sphi 0, %s20
      %s24 = sphi 0, %s21
      %s25 = sphi 0, %s22
      %s26 = sphi 0, %s23
      %s27 = sphi 0, %s24
      %s43 = sphi 0, %s45
      %s46 = sphi 0, %s43
      %s47 = sphi 0, %s46
      %s63 = sphi 0, %s47
      %s71 = sphi 0, %s73
      %s74 = sphi 0, %s71
      %s75 = sphi 0, %s74
      %s91 = sphi 0, %s75
      %s95 = sphi 0, %s95
      %s97 = sphi 0, %s95
      %s98 = sphi 0, %s97
      %s112 = sphi 0, %s98
      %s120 = sphi 0, %s122
      %s123 = sphi 0, %s120
      %s124 = sphi 0, %s123
      %s140 = sphi 0, %s124
    $region4: #{gcn_forward.1} parent=1 // loop_header_branch
      %15 = sbr.rel (%p13) target = $region8
    $region5: #{gcn_forward.1} parent=1 // loop_body
      %s17 = ssub.s32 %s12, 1
      %s18 = ssub.s32 %s12, 2
      %s28 = sadd.s32 1, %s21
      %p29 = scmp.ge.s32.totalorder %s28, 1
      %s30 = scalar_select %p29, 0, %s28
      %s31 = sadd.s32 1, %s20
      %s32 = scalar_select %p29, %s31, %s20
      %p33 = scmp.ge.s32.totalorder %s32, 1
      %s34 = scalar_select %p33, 0, %s32
      %s35 = sadd.s32 1, %s19
      %s36 = scalar_select %p33, %s35, %s19
      %p37 = scmp.ge.s32.totalorder %s36, 2
      %s38 = scalar_select %p37, 0, %s36
      %s39 = ssub.s32 %s20, %s34
      %s40 = ssub.s32 %s21, %s30
      %s41 = sor.u32 %s39, %s40
      %p42 = scmp.eq.s32.totalorder %s41, 0
      %s44 = sadd.s32 %s43, 1
      %s45 = scalar_select %p42, %s43, %s44
      %p48 = pneg %p42
      %p49 = scmp.eq.s32.totalorder %s12, 1
      %p50 = por %p48, %p49
      %p51 = scmp.ne.s32.totalorder %s43, %s46
      %p52 = scmp.eq.s32.totalorder %s12, 0
      %p53 = por %p51, %p52
      %p54 = scmp.ne.s32.totalorder %s43, %s46
      %p55 = scmp.eq.s32.totalorder %s17, 1
      %p56 = por %p54, %p55
      %p57 = scmp.ne.s32.totalorder %s46, %s47
      %p58 = scmp.eq.s32.totalorder %s17, 0
      %p59 = por %p57, %p58
      %p60 = scmp.ne.s32.totalorder %s46, %s47
      %p61 = scmp.eq.s32.totalorder %s18, 1
      %p62 = por %p60, %p61
      %p64 = scmp.ne.s32.totalorder %s47, %s63
      %p65 = scmp.eq.s32.totalorder %s18, 0
      %p66 = por %p64, %p65
      %s67 = ssub.s32 %s19, %s38
      %s68 = ssub.s32 %s21, %s30
      %s69 = sor.u32 %s67, %s68
      %p70 = scmp.eq.s32.totalorder %s69, 0
      %s72 = sadd.s32 %s71, 1
      %s73 = scalar_select %p70, %s71, %s72
      %p76 = pneg %p70
      %p77 = scmp.eq.s32.totalorder %s12, 1
      %p78 = por %p76, %p77
      %p79 = scmp.ne.s32.totalorder %s71, %s74
      %p80 = scmp.eq.s32.totalorder %s12, 0
      %p81 = por %p79, %p80
      %p82 = scmp.ne.s32.totalorder %s71, %s74
      %p83 = scmp.eq.s32.totalorder %s17, 1
      %p84 = por %p82, %p83
      %p85 = scmp.ne.s32.totalorder %s74, %s75
      %p86 = scmp.eq.s32.totalorder %s17, 0
      %p87 = por %p85, %p86
      %p88 = scmp.ne.s32.totalorder %s74, %s75
      %p89 = scmp.eq.s32.totalorder %s18, 1
      %p90 = por %p88, %p89
      %p92 = scmp.ne.s32.totalorder %s75, %s91
      %p93 = scmp.eq.s32.totalorder %s18, 0
      %p94 = por %p92, %p93
      %s96 = sadd.s32 %s95, 1
      %p99 = scmp.eq.s32.totalorder %s12, 1
      %p100 = scmp.ne.s32.totalorder %s95, %s97
      %p101 = scmp.eq.s32.totalorder %s12, 0
      %p102 = por %p100, %p101
      %p103 = scmp.ne.s32.totalorder %s95, %s97
      %p104 = scmp.eq.s32.totalorder %s17, 1
      %p105 = por %p103, %p104
      %p106 = scmp.ne.s32.totalorder %s97, %s98
      %p107 = scmp.eq.s32.totalorder %s17, 0
      %p108 = por %p106, %p107
      %p109 = scmp.ne.s32.totalorder %s97, %s98
      %p110 = scmp.eq.s32.totalorder %s18, 1
      %p111 = por %p109, %p110
      %p113 = scmp.ne.s32.totalorder %s98, %s112
      %p114 = scmp.eq.s32.totalorder %s18, 0
      %p115 = por %p113, %p114
      %s116 = ssub.s32 %s19, %s38
      %s117 = ssub.s32 %s20, %s34
      %s118 = sor.u32 %s116, %s117
      %p119 = scmp.eq.s32.totalorder %s118, 0
      %s121 = sadd.s32 %s120, 1
      %s122 = scalar_select %p119, %s120, %s121
      %p125 = pneg %p119
      %p126 = scmp.eq.s32.totalorder %s12, 1
      %p127 = por %p125, %p126
      %p128 = scmp.ne.s32.totalorder %s120, %s123
      %p129 = scmp.eq.s32.totalorder %s12, 0
      %p130 = por %p128, %p129
      %p131 = scmp.ne.s32.totalorder %s120, %s123
      %p132 = scmp.eq.s32.totalorder %s17, 1
      %p133 = por %p131, %p132
      %p134 = scmp.ne.s32.totalorder %s123, %s124
      %p135 = scmp.eq.s32.totalorder %s17, 0
      %p136 = por %p134, %p135
      %p137 = scmp.ne.s32.totalorder %s123, %s124
      %p138 = scmp.eq.s32.totalorder %s18, 1
      %p139 = por %p137, %p138
      %p141 = scmp.ne.s32.totalorder %s124, %s140
      %p142 = scmp.eq.s32.totalorder %s18, 0
      %p143 = por %p141, %p142
      %p144 = scmp.le.s32.totalorder 1, %s12
      %p145 = scmp.lt.s32.totalorder %s12, 3
      %p146 = pnand %p144, %p145
      %p147 = pneg %p146
      // Predicated region
      $region9: #{gcn_forward.1} parent=5 // pred_check
        _
      $region10: #{gcn_forward.1} parent=5 // pred_check_branch
        %149 = sbr.rel (%p146) target = $region12
      $region11: #{gcn_forward.1} parent=5 // pred_region
        %s150 = ssub.s32 %s12, 1
        // Predicated region
        $region13: #{gcn_forward.1} parent=11 // pred_check
          %p151 = pneg %p59
        $region14: #{gcn_forward.1} parent=11 // pred_check_branch
          %153 = sbr.rel (%p151) target = $region16
        $region15: #{gcn_forward.1} parent=11 // pred_region
          %s154 = smul.u32 2, %s23
          %p155 = scmp.lt.s32.totalorder %s154, 1
          %s156 = scalar_select %p155, %s154, 1
          %p157 = scmp.lt.s32.totalorder %s24, 0
          %s158 = scalar_select %p157, %s24, 0
          %s159 = sadd.s32 %s158, %s156
          %s160 = smul.addr %s159, 4
          %s161 = scalar_lea.vmem %s0, %s160
          %s162 = smul.u32 2, %s23
        $region16: #{gcn_forward.1} parent=11 // pred_fallthru
          _
        // Predicated region
        $region17: #{gcn_forward.1} parent=11 // pred_check
          %p163 = pneg %p108
        $region18: #{gcn_forward.1} parent=11 // pred_check_branch
          %165 = sbr.rel (%p163) target = $region20
        $region19: #{gcn_forward.1} parent=11 // pred_region
          _
        $region20: #{gcn_forward.1} parent=11 // pred_fallthru
          _
      $region12: #{gcn_forward.1} parent=5 // pred_fallthru
        _
      %p166 = scmp.lt.s32.totalorder %s12, 2
      // Predicated region
      $region21: #{gcn_forward.1} parent=5 // pred_check
        %p167 = pneg %p166
      $region22: #{gcn_forward.1} parent=5 // pred_check_branch
        %169 = sbr.rel (%p167) target = $region24
      $region23: #{gcn_forward.1} parent=5 // pred_region
        // Predicated region
        $region25: #{gcn_forward.1} parent=23 // pred_check
          %p170 = pneg %p81
        $region26: #{gcn_forward.1} parent=23 // pred_check_branch
          %172 = sbr.rel (%p170) target = $region28
        $region27: #{gcn_forward.1} parent=23 // pred_region
          %s173 = smul.u32 16, %s21
          %p174 = scmp.lt.s32.totalorder %s19, 1
          %s175 = scalar_select %p174, %s19, 1
          %p176 = scmp.lt.s32.totalorder %s173, 15
          %s177 = scalar_select %p176, %s173, 15
          %s178 = smul.addr %s175, 16
          %s179 = sadd.s32 %s177, %s178
          %s180 = smul.addr %s179, 4
          %s181 = scalar_lea.vmem %s1, %s180
          %s182 = smul.u32 16, %s21
        $region28: #{gcn_forward.1} parent=23 // pred_fallthru
          _
      $region24: #{gcn_forward.1} parent=5 // pred_fallthru
        _
      %p183 = scmp.le.s32.totalorder 1, %s12
      %p184 = scmp.lt.s32.totalorder %s12, 3
      %p185 = pnand %p183, %p184
      %p186 = pneg %p185
      // Predicated region
      $region29: #{gcn_forward.1} parent=5 // pred_check
        _
      $region30: #{gcn_forward.1} parent=5 // pred_check_branch
        %188 = sbr.rel (%p185) target = $region32
      $region31: #{gcn_forward.1} parent=5 // pred_region
        %s189 = ssub.s32 %s12, 1
        %s190 = smul.u32 2, %s23
        %p191 = scmp.lt.s32.totalorder %s190, 1
        %s192 = scalar_select %p191, %s190, 1
        %p193 = scmp.lt.s32.totalorder %s24, 0
        %s194 = scalar_select %p193, %s24, 0
        %s195 = sadd.s32 %s194, %s192
        %s196 = smul.addr %s195, 4
        %s197 = scalar_lea.vmem %s0, %s196
        %p198 = pneg %p59
        %p199 = pneg %p56
        %s200 = smul.u32 16, %s24
        %p201 = scmp.lt.s32.totalorder %s22, 1
        %s202 = scalar_select %p201, %s22, 1
        %p203 = scmp.lt.s32.totalorder %s200, 15
        %s204 = scalar_select %p203, %s200, 15
        %s205 = smul.addr %s202, 16
        %s206 = sadd.s32 %s204, %s205
        %s207 = smul.addr %s206, 4
        %s208 = scalar_lea.vmem %s1, %s207
        %p209 = pneg %p87
        %p210 = pneg %p84
        %p211 = pneg %p108
        %p212 = pneg %p105
        %p213 = pneg %p136
        %p214 = pneg %p133
        %s215 = sand.u32 %s123, 1
        %s216 = scalar_lea.sflag [#allocation4], %s215
        %s217 = sand.u32 %s123, 1
        %s218 = smul.addr %s217, 16
        %s219 = scalar_lea.vmem [#allocation3], %s218
        %s220 = smul.u32 2, %s23
        %p221 = scmp.lt.s32.totalorder %s220, 1
        %s222 = scalar_select %p221, %s220, 1
        %p223 = scmp.lt.s32.totalorder %s24, 0
        %s224 = scalar_select %p223, %s24, 0
        %s225 = sadd.s32 %s224, %s222
        %s226 = smul.addr %s225, 4
        %s227 = scalar_lea.vmem %s0, %s226
        %s228 = smul.u32 2, %s23
        %s229 = smul.u32 16, %s24
        %p230 = scmp.lt.s32.totalorder %s22, 1
        %s231 = scalar_select %p230, %s22, 1
        %p232 = scmp.lt.s32.totalorder %s229, 15
        %s233 = scalar_select %p232, %s229, 15
        %s234 = smul.addr %s231, 16
        %s235 = sadd.s32 %s233, %s234
        %s236 = smul.addr %s235, 4
        %s237 = scalar_lea.vmem %s1, %s236
        %s238 = smul.u32 16, %s24
        %s239 = smul.u32 2, %s23
        %p241 = scmp.eq.s32.totalorder %s24, 0
        // Predicated region
        $region33: #{gcn_forward.1} parent=31 // pred_check
          %p242 = pneg %p241
        $region34: #{gcn_forward.1} parent=31 // pred_check_branch
          %244 = sbr.rel (%p242) target = $region36
        $region35: #{gcn_forward.1} parent=31 // pred_region
          %245 = vst [vmem:[#allocation2] sm:$0xff] 0.0
          %246 = vst [vmem:[#allocation2 + $0x8] sm:$0xff] 0.0
        $region36: #{gcn_forward.1} parent=31 // pred_fallthru
          _
        %v247 = vld [vmem:[#allocation2] sm:$0xff]
        %v248 = vld [vmem:[#allocation2 + $0x8] sm:$0xff]
        %v249 = vld [vmem:[%s227] sm:$0xf]
        %v250 = vld [vmem:[%s227 + $0x4] sm:$0xf]
        %v251 = vld [vmem:[%s237] sm:$0xf]
        %v252 = vld [vmem:[%s237 + $0x4] sm:$0xf]
        %v253 = vld [vmem:[%s237 + $0x8] sm:$0xf]
        %v254 = vld [vmem:[%s237 + $0xc] sm:$0xf]
        %v255 = vld [vmem:[%s237 + $0x10] sm:$0xf]
        %v256 = vld [vmem:[%s237 + $0x14] sm:$0xf]
        %v257 = vld [vmem:[%s237 + $0x18] sm:$0xf]
        %v258 = vld [vmem:[%s237 + $0x1c] sm:$0xf]
        %v259 = vld [vmem:[%s237 + $0x20] sm:$0xf]
        %v260 = vld [vmem:[%s237 + $0x24] sm:$0xf]
        %v261 = vld [vmem:[%s237 + $0x28] sm:$0xf]
        %v262 = vld [vmem:[%s237 + $0x2c] sm:$0xf]
        %v263 = vld [vmem:[%s237 + $0x30] sm:$0xf]
        %v264 = vld [vmem:[%s237 + $0x34] sm:$0xf]
        %v265 = vld [vmem:[%s237 + $0x38] sm:$0xf]
        %v266 = vld [vmem:[%s237 + $0x3c] sm:$0xf]
        %v269 = vunpack.c.l.b16 %v249
        %v270 = vunpack.c.l.b16 %v250
        %v271 = vpack.c.b16 %v270, %v269
        %v289 = vunpack.c.l.b16 %v251
        %v290 = vunpack.c.l.b16 %v252
        %v291 = vunpack.c.l.b16 %v253
        %v292 = vunpack.c.l.b16 %v254
        %v293 = vunpack.c.l.b16 %v255
        %v294 = vunpack.c.l.b16 %v256
        %v295 = vunpack.c.l.b16 %v257
        %v296 = vunpack.c.l.b16 %v258
        %v297 = vunpack.c.l.b16 %v259
        %v298 = vunpack.c.l.b16 %v260
        %v299 = vunpack.c.l.b16 %v261
        %v300 = vunpack.c.l.b16 %v262
        %v301 = vunpack.c.l.b16 %v263
        %v302 = vunpack.c.l.b16 %v264
        %v303 = vunpack.c.l.b16 %v265
        %v304 = vunpack.c.l.b16 %v266
        %v305 = vpack.c.b16 %v290, %v289
        %v306 = vpack.c.b16 %v292, %v291
        %v307 = vpack.c.b16 %v294, %v293
        %v308 = vpack.c.b16 %v296, %v295
        %v309 = vpack.c.b16 %v298, %v297
        %v310 = vpack.c.b16 %v300, %v299
        %v311 = vpack.c.b16 %v302, %v301
        %v312 = vpack.c.b16 %v304, %v303
        %321 = vmatprep.subr.bf16.mxu0 0
        %322 = vmatpush1.bf16.msra.mxu0 %v305
        %323 = vmatprep.subr.bf16.mxu0 0
        %324 = vmatpush1.bf16.msra.mxu0 %v306
        %325 = vmatprep.subr.bf16.mxu0 0
        %326 = vmatpush1.bf16.msra.mxu0 %v307
        %327 = vmatprep.subr.bf16.mxu0 0
        %328 = vmatpush1.bf16.msra.mxu0 %v308
        %329 = vmatprep.subr.bf16.mxu0 0
        %330 = vmatpush1.bf16.msra.mxu0 %v309
        %331 = vmatprep.subr.bf16.mxu0 0
        %332 = vmatpush1.bf16.msra.mxu0 %v310
        %333 = vmatprep.subr.bf16.mxu0 0
        %334 = vmatpush1.bf16.msra.mxu0 %v311
        %335 = vmatprep.subr.bf16.mxu0 0
        %336 = vmatpush1.bf16.msra.mxu0 %v312
        %337 = vmatprep.subr.bf16.mxu0 0
        %338 = vmatpush1.bf16.msra.mxu0 0
        %339 = vmatprep.subr.bf16.mxu0 0
        %340 = vmatpush1.bf16.msra.mxu0 0
        %341 = vmatprep.subr.bf16.mxu0 0
        %342 = vmatpush1.bf16.msra.mxu0 0
        %343 = vmatprep.subr.bf16.mxu0 0
        %344 = vmatpush1.bf16.msra.mxu0 0
        %345 = vmatprep.subr.bf16.mxu0 0
        %346 = vmatpush1.bf16.msra.mxu0 0
        %347 = vmatprep.subr.bf16.mxu0 0
        %348 = vmatpush1.bf16.msra.mxu0 0
        %349 = vmatprep.subr.bf16.mxu0 0
        %350 = vmatpush1.bf16.msra.mxu0 0
        %351 = vmatprep.subr.bf16.mxu0 0
        %352 = vmatpush1.bf16.msra.mxu0 0
        %353 = vmatprep.mubr.bf16.mxu0 0
        %354 = vmatmul.mubr.bf16.gmra.mrb[0].mxu0 %v271
        %v355 = vpop.f32.mrb[0].mxu0
        %v356 = vadd.f32 0.0, %v355
        %v357 = vpop.f32.mrb[0].mxu0
        %v358 = vpop.f32.mrb[0].mxu0
        %v359 = vadd.f32 0.0, %v358
        %v360 = vpop.f32.mrb[0].mxu0
        %361 = vdwg.mxu0
        %v362 = vadd.f32 %v247, %v356
        %v363 = vadd.f32 %v248, %v359
        %364 = vst [vmem:[#allocation2] sm:$0xff] %v362
        %365 = vst [vmem:[#allocation2 + $0x8] sm:$0xff] %v363
        // Predicated region
        $region37: #{gcn_forward.1} parent=31 // pred_check
          %p366 = pneg %p241
        $region38: #{gcn_forward.1} parent=31 // pred_check_branch
          %368 = sbr.rel (%p366) target = $region40
        $region39: #{gcn_forward.1} parent=31 // pred_region
          %v369 = vld [vmem:[#allocation2] sm:$0xff]
          %v370 = vld [vmem:[#allocation2 + $0x8] sm:$0xff]
          %v371 = vld [vmem:[%s2] sm:$0xff]
          %v372 = vld [vmem:[%s2 + $0x8] sm:$0xff]
          %v373 = vld [vmem:[%s2 + $0x10] sm:$0xff]
          %v374 = vld [vmem:[%s2 + $0x18] sm:$0xff]
          %v375 = vld [vmem:[%s2 + $0x20] sm:$0xff]
          %v376 = vld [vmem:[%s2 + $0x28] sm:$0xff]
          %v377 = vld [vmem:[%s2 + $0x30] sm:$0xff]
          %v378 = vld [vmem:[%s2 + $0x38] sm:$0xff]
          %v379 = vld [vmem:[%s2 + $0x40] sm:$0xff]
          %v380 = vld [vmem:[%s2 + $0x48] sm:$0xff]
          %v381 = vld [vmem:[%s2 + $0x50] sm:$0xff]
          %v382 = vld [vmem:[%s2 + $0x58] sm:$0xff]
          %v383 = vld [vmem:[%s2 + $0x60] sm:$0xff]
          %v384 = vld [vmem:[%s2 + $0x68] sm:$0xff]
          %v385 = vld [vmem:[%s2 + $0x70] sm:$0xff]
          %v386 = vld [vmem:[%s2 + $0x78] sm:$0xff]
          %387 = vmatprep.subr.mxu0 0.0
          %388 = vmatpush1.msra.mxu0 %v371
          %389 = vmatprep.subr.mxu0 0.0
          %390 = vmatpush1.msra.mxu0 %v372
          %391 = vmatprep.subr.mxu0 0.0
          %392 = vmatpush1.msra.mxu0 %v373
          %393 = vmatprep.subr.mxu0 0.0
          %394 = vmatpush1.msra.mxu0 %v374
          %395 = vmatprep.subr.mxu0 0.0
          %396 = vmatpush1.msra.mxu0 %v375
          %397 = vmatprep.subr.mxu0 0.0
          %398 = vmatpush1.msra.mxu0 %v376
          %399 = vmatprep.subr.mxu0 0.0
          %400 = vmatpush1.msra.mxu0 %v377
          %401 = vmatprep.subr.mxu0 0.0
          %402 = vmatpush1.msra.mxu0 %v378
          %403 = vmatprep.subr.mxu0 0.0
          %404 = vmatpush1.msra.mxu0 %v379
          %405 = vmatprep.subr.mxu0 0.0
          %406 = vmatpush1.msra.mxu0 %v380
          %407 = vmatprep.subr.mxu0 0.0
          %408 = vmatpush1.msra.mxu0 %v381
          %409 = vmatprep.subr.mxu0 0.0
          %410 = vmatpush1.msra.mxu0 %v382
          %411 = vmatprep.subr.mxu0 0.0
          %412 = vmatpush1.msra.mxu0 %v383
          %413 = vmatprep.subr.mxu0 0.0
          %414 = vmatpush1.msra.mxu0 %v384
          %415 = vmatprep.subr.mxu0 0.0
          %416 = vmatpush1.msra.mxu0 %v385
          %417 = vmatprep.subr.mxu0 0.0
          %418 = vmatpush1.msra.mxu0 %v386
          %419 = vmatprep.subr.mxu0 0.0
          %420 = vmatpush1.msra.mxu0 0.0
          %421 = vmatprep.subr.mxu0 0.0
          %422 = vmatpush1.msra.mxu0 0.0
          %423 = vmatprep.subr.mxu0 0.0
          %424 = vmatpush1.msra.mxu0 0.0
          %425 = vmatprep.subr.mxu0 0.0
          %426 = vmatpush1.msra.mxu0 0.0
          %427 = vmatprep.subr.mxu0 0.0
          %428 = vmatpush1.msra.mxu0 0.0
          %429 = vmatprep.subr.mxu0 0.0
          %430 = vmatpush1.msra.mxu0 0.0
          %431 = vmatprep.subr.mxu0 0.0
          %432 = vmatpush1.msra.mxu0 0.0
          %433 = vmatprep.subr.mxu0 0.0
          %434 = vmatpush1.msra.mxu0 0.0
          %435 = vmatprep.subr.mxu0 0.0
          %436 = vmatpush1.msra.mxu0 0.0
          %437 = vmatprep.subr.mxu0 0.0
          %438 = vmatpush1.msra.mxu0 0.0
          %439 = vmatprep.subr.mxu0 0.0
          %440 = vmatpush1.msra.mxu0 0.0
          %441 = vmatprep.subr.mxu0 0.0
          %442 = vmatpush1.msra.mxu0 0.0
          %443 = vmatprep.subr.mxu0 0.0
          %444 = vmatpush1.msra.mxu0 0.0
          %445 = vmatprep.subr.mxu0 0.0
          %446 = vmatpush1.msra.mxu0 0.0
          %447 = vmatprep.subr.mxu0 0.0
          %448 = vmatpush1.msra.mxu0 0.0
          %449 = vmatprep.subr.mxu0 0.0
          %450 = vmatpush1.msra.mxu0 0.0
          %451 = vmatprep.mubr.f32.mxu0 0.0
          %452 = vmatmul.mubr.f32.gmra.mrb[0].mxu0 %v369
          %v453 = vpop.f32.mrb[0].mxu0
          %v454 = vadd.f32 0.0, %v453
          %v455 = vpop.f32.mrb[0].mxu0
          %456 = vmatprep.mubr.f32.mxu0 0.0
          %457 = vmatmul.mubr.f32.gmra.mrb[0].mxu0 %v370
          %v458 = vpop.f32.mrb[0].mxu0
          %v459 = vadd.f32 0.0, %v458
          %v460 = vpop.f32.mrb[0].mxu0
          %461 = vdwg.mxu0
          %v462 = vmax.f32 %v454, 0.0
          %v463 = vmax.f32 %v459, 0.0
          %464 = vst [vmem:[%s219] sm:$0xff] %v462
          %465 = vst [vmem:[%s219 + $0x8] sm:$0xff] %v463
        $region40: #{gcn_forward.1} parent=31 // pred_fallthru
          _
        %s466 = sand.u32 %s123, 1
        %s467 = scalar_lea.sflag [#allocation4], %s466
        %s468 = sand.u32 %s123, 1
        %s469 = smul.addr %s468, 16
        %s470 = scalar_lea.vmem [#allocation3], %s469
        // Predicated region
        $region41: #{gcn_forward.1} parent=31 // pred_check
          %p471 = pneg %p133
        $region42: #{gcn_forward.1} parent=31 // pred_check_branch
          %473 = sbr.rel (%p471) target = $region44
        $region43: #{gcn_forward.1} parent=31 // pred_region
          %s474 = smul.u32 2, %s23
          %s476 = ssub.s32 256, 256
          %477 = vsyncadd %s467, %s476
          %s478 = smul.addr %s22, 2
          %s479 = sadd.s32 %s474, %s478
          %s480 = smul.addr %s479, 128
          %s481 = scalar_lea.hbm %s3, %s480
          %s482 = sshll.u32 %s470, 4
          %s483 = int_to_ptr.vmem [resolvable:$true] %s482
          %488 = dma.vmem_to_hbm [thread:$0]  %s483, 256, %s481, %s467, 128, 128, 8
        $region44: #{gcn_forward.1} parent=31 // pred_fallthru
          _
      $region32: #{gcn_forward.1} parent=5 // pred_fallthru
        _
      %p489 = scmp.le.s32.totalorder 2, %s12
      // Predicated region
      $region45: #{gcn_forward.1} parent=5 // pred_check
        %p490 = pneg %p489
      $region46: #{gcn_forward.1} parent=5 // pred_check_branch
        %492 = sbr.rel (%p490) target = $region48
      $region47: #{gcn_forward.1} parent=5 // pred_region
        %s493 = ssub.s32 %s12, 2
        // Predicated region
        $region49: #{gcn_forward.1} parent=47 // pred_check
          %p494 = pneg %p139
        $region50: #{gcn_forward.1} parent=47 // pred_check_branch
          %496 = sbr.rel (%p494) target = $region52
        $region51: #{gcn_forward.1} parent=47 // pred_region
          %s497 = sand.u32 %s124, 1
          %s498 = scalar_lea.sflag [#allocation4], %s497
          %s499 = sand.u32 %s124, 1
          %s500 = smul.addr %s499, 16
          %s501 = scalar_lea.vmem [#allocation3], %s500
          %502 = dma.done %s498, 256
        $region52: #{gcn_forward.1} parent=47 // pred_fallthru
          _
      $region48: #{gcn_forward.1} parent=5 // pred_fallthru
        _
    $region6: #{gcn_forward.1} parent=1 // loop_footer
      %s16 = sadd.s32 1, %s12
    $region7: #{gcn_forward.1} parent=1 // loop_footer_branch
      %11 = sbr.rel target = $region3
    $region8: #{gcn_forward.1} parent=1 // loop_exit
      _
    %503 = vsyncpa [#allocation4], 1
    %s504 = scalar_lea.sflag [#allocation4], 1
    %505 = vsyncpa %s504, 1

</llo_original>
